<compile_context>
chip_gen: v7x
topology: tpu7x:2x2x1
jax: 0.10.0
libtpu: 0.0.40
codegen_flags: <defaults>
</compile_context>

<pallas_src>
import functools
import math
from typing import NamedTuple

import jax
import jax.numpy as jnp
import numpy as np
from jax.experimental import pallas as pl
from jax.experimental.pallas import tpu as pltpu


def _round_up(x, m):
    return ((x + m - 1) // m) * m


def _vmem_capacity_bytes():
    # Generation-aware physical VMEM (64 MiB/TC on v7x, 128 MiB on v5e/v6e).
    try:
        return int(pltpu.get_tpu_info().vmem_capacity_bytes)
    except Exception:
        return 64 << 20  # conservative fallback (v7x per-TensorCore)


class PreparedParams(NamedTuple):
    """Padded / pre-cast parameters (built once, outside the hot path)."""
    w1: jax.Array     # (F,  Hp) weight_dtype
    b1: jax.Array     # (1,  Hp) f32
    w2: jax.Array     # (Hp, Hp) weight_dtype
    b2: jax.Array     # (1,  Hp) f32
    freqs: jax.Array  # (1, F//2) f32


def prepare_params(params, frequency_embedding_size=256, max_period=10000,
                   weight_dtype=jnp.float32):
    """Pad weights to lane-dense Hp and cast to weight_dtype, ONCE."""
    w1, b1, w2, b2 = params
    F = frequency_embedding_size
    assert F % 2 == 0, "odd frequency_embedding_size not supported"
    half = F // 2
    H = w1.shape[1]
    Hp = _round_up(H, 128)
    wdt = jnp.dtype(weight_dtype)

    freqs = np.exp(
        -math.log(max_period) * np.arange(half, dtype=np.float32) / half
    ).reshape(1, half)

    return PreparedParams(
        w1=jnp.pad(w1, ((0, 0), (0, Hp - H))).astype(wdt),
        b1=jnp.pad(b1.reshape(1, H), ((0, 0), (0, Hp - H))).astype(jnp.float32),
        w2=jnp.pad(w2, ((0, Hp - H), (0, Hp - H))).astype(wdt),
        b2=jnp.pad(b2.reshape(1, H), ((0, 0), (0, Hp - H))).astype(jnp.float32),
        freqs=jnp.asarray(freqs),
    )


def _timestep_embedder_kernel(t_ref, freqs_ref, w1_ref, b1_ref, w2_ref, b2_ref,
                              out_ref, h_ref, *, approx_sigmoid):
    # t_ref:     (TN, 1)    f32
    # freqs_ref: (1, half)  f32
    # w1_ref:    (F, Hp)    f32/bf16   (resident; constant index map)
    # b1_ref:    (1, Hp)    f32        (resident)
    # w2_ref:    (Hp, TH)   f32/bf16   (streamed column tile)
    # b2_ref:    (1, TH)    f32        (column tile)
    # out_ref:   (TN, TH)   out dtype  (column tile)
    # h_ref:     (TN, Hp)   f32/bf16   scratch (SiLU(emb @ W1 + b1))
    col = pl.program_id(1)

    @pl.when(col == 0)
    def _():
        t = t_ref[...]                              # (TN, 1)
        args = t * freqs_ref[...]                   # (TN, half) broadcast
        # Single K=F matmul (full MXU depth on v6e/v7x).  The (TN, F)
        # concatenated embedding is a tiny VMEM temporary.
        emb = jnp.concatenate([jnp.cos(args), jnp.sin(args)], axis=-1)
        h = jnp.dot(emb.astype(w1_ref.dtype), w1_ref[...],
                    preferred_element_type=jnp.float32)
        h = h + b1_ref[...]
        # SiLU(x) = x * sigmoid(x), computed in f32.
        h = h * pl.reciprocal(1.0 + jnp.exp(-h), approx=approx_sigmoid)
        h_ref[...] = h.astype(h_ref.dtype)

    o = jnp.dot(h_ref[...], w2_ref[...], preferred_element_type=jnp.float32)
    out_ref[...] = (o + b2_ref[...]).astype(out_ref.dtype)


@functools.partial(jax.jit, static_argnames=("hidden_size", "out_dtype"))
def timestep_embedder(t, prep: PreparedParams, hidden_size,
                      out_dtype=jnp.float32):
    """t: (N,) float timesteps. Returns (N, hidden_size) embeddings."""
    N = t.shape[0]
    H = hidden_size
    half = prep.freqs.shape[1]
    F = 2 * half
    Hp = prep.w1.shape[1]
    wdt = prep.w1.dtype
    odt = jnp.dtype(out_dtype)

    # --- Row tiling: aim for >=2 row tiles (dual-TC on v7x, output-store
    # pipelining) without over-padding the last tile; 16-row aligned so bf16
    # casts of cos/sin/h pack cleanly along sublanes.
    tiles = -(-N // 512)
    if N >= 32:
        tiles = max(tiles, 2)
    TN = _round_up(-(-N // tiles), 16)
    Np = _round_up(N, TN)

    # --- Column tiling of the hidden dim: stream W2 in (Hp, TH) tiles.
    TH = Hp
    for cand in (512, 384, 256, 128):
        if Hp % cand == 0:
            TH = min(TH, cand)
            break

    t_col = t.astype(jnp.float32).reshape(N, 1)
    if Np != N:
        t_col = jnp.pad(t_col, ((0, Np - N), (0, 0)))

    # --- VMEM budget: double-buffered blocks + h scratch + f32 temporaries.
    wsz = wdt.itemsize
    est = (
        2 * F * Hp * wsz                      # W1 (resident, 2 buffers)
        + 2 * Hp * TH * wsz                   # W2 column tile (streamed)
        + 2 * 4 * (Hp + TH + half + TN)       # b1, b2, freqs, t
        + 2 * TN * TH * odt.itemsize          # output tile
        + TN * Hp * wsz                       # h scratch
        + 4 * TN * (3 * F + 2 * Hp)           # cos/sin/emb + dot temporaries
        + (2 << 20))                          # compiler scratch headroom
    vmem_limit = int(min(max(est, 32 << 20),
                         int(0.85 * _vmem_capacity_bytes())))

    kernel = functools.partial(_timestep_embedder_kernel,
                               approx_sigmoid=(wdt != jnp.float32))

    out = pl.pallas_call(
        kernel,
        out_shape=jax.ShapeDtypeStruct((Np, Hp), odt),
        grid=(Np // TN, Hp // TH),
        in_specs=[
            pl.BlockSpec((TN, 1), lambda i, j: (i, 0)),      # t (row tile)
            pl.BlockSpec((1, half), lambda i, j: (0, 0)),    # freqs (resident)
            pl.BlockSpec((F, Hp), lambda i, j: (0, 0)),      # W1 (resident)
            pl.BlockSpec((1, Hp), lambda i, j: (0, 0)),      # b1 (resident)
            pl.BlockSpec((Hp, TH), lambda i, j: (0, j)),     # W2 (col stream)
            pl.BlockSpec((1, TH), lambda i, j: (0, j)),      # b2 (col tile)
        ],
        out_specs=pl.BlockSpec((TN, TH), lambda i, j: (i, j)),
        scratch_shapes=[pltpu.VMEM((TN, Hp), wdt)],          # h
        compiler_params=pltpu.CompilerParams(
            dimension_semantics=("parallel", "arbitrary"),
            vmem_limit_bytes=vmem_limit),
    )(t_col, prep.freqs, prep.w1, prep.b1, prep.w2, prep.b2)

    if Np != N or Hp != H:
        out = out[:N, :H]
    return out


def init_params(key, hidden_size, frequency_embedding_size=256):
    k1, k2, k3, k4 = jax.random.split(key, 4)
    F, H = frequency_embedding_size, hidden_size
    # deterministic synthetic init (roughly like PyTorch default uniform)
    w1 = jax.random.uniform(k1, (F, H), jnp.float32, -1.0, 1.0) / math.sqrt(F)
    b1 = jax.random.uniform(k2, (H,), jnp.float32, -1.0, 1.0) / math.sqrt(F)
    w2 = jax.random.uniform(k3, (H, H), jnp.float32, -1.0, 1.0) / math.sqrt(H)
    b2 = jax.random.uniform(k4, (H,), jnp.float32, -1.0, 1.0) / math.sqrt(H)
    return (w1, b1, w2, b2)


def _reference(t, params, frequency_embedding_size=256, max_period=10000):
    w1, b1, w2, b2 = params
    half = frequency_embedding_size // 2
    freqs = jnp.exp(
        -math.log(max_period) * jnp.arange(half, dtype=jnp.float32) / half)
    args = t.astype(jnp.float32)[:, None] * freqs[None]
    emb = jnp.concatenate([jnp.cos(args), jnp.sin(args)], axis=-1)
    h = emb @ w1 + b1
    h = h * jax.nn.sigmoid(h)
    return h @ w2 + b2


if __name__ == "__main__":
    key = jax.random.PRNGKey(0)
    k_t, k_p = jax.random.split(key)

    N = 8              # batch of timesteps
    HIDDEN = 32        # hidden_size (padded to 128 lanes inside the kernel)
    FREQ = 256         # frequency_embedding_size (module default)

    t = jax.random.uniform(k_t, (N,), jnp.float32, 0.0, 1000.0)
    params = init_params(k_p, HIDDEN, FREQ)
    ref = _reference(t, params, FREQ)

    # f32-weight path: must match the reference tightly.
    prep_f32 = prepare_params(params, FREQ, weight_dtype=jnp.float32)
    out_f32 = jax.block_until_ready(
        timestep_embedder(t, prep_f32, hidden_size=HIDDEN))
    assert out_f32.shape == (N, HIDDEN)
    assert jnp.allclose(out_f32, ref, atol=1e-4, rtol=1e-4), "f32 mismatch"

    # bf16-weight fast path (halved weight DMA, f32 accumulation): loose check.
    prep_bf16 = prepare_params(params, FREQ, weight_dtype=jnp.bfloat16)
    out_bf16 = jax.block_until_ready(
        timestep_embedder(t, prep_bf16, hidden_size=HIDDEN))
    assert out_bf16.shape == (N, HIDDEN)
    assert jnp.allclose(out_bf16, ref, atol=0.1, rtol=0.1), "bf16 mismatch"

    print("KERNEL_OK")
</pallas_src>

<mosaic_0001>
module attributes {stable_mosaic.version = 11 : i64} {
  func.func @_timestep_embedder_kernel(%arg0: i32, %arg1: i32, %arg2: memref<16x1xf32, #tpu.memory_space<vmem>>, %arg3: memref<1x128xf32, #tpu.memory_space<vmem>>, %arg4: memref<256x128xf32, #tpu.memory_space<vmem>>, %arg5: memref<1x128xf32, #tpu.memory_space<vmem>>, %arg6: memref<128x128xf32, #tpu.memory_space<vmem>>, %arg7: memref<1x128xf32, #tpu.memory_space<vmem>>, %arg8: memref<16x128xf32, #tpu.memory_space<vmem>>, %arg9: memref<16x128xf32, #tpu.memory_space<vmem>>) attributes {dimension_semantics = [#tpu.dimension_semantics<parallel>, #tpu.dimension_semantics<arbitrary>], iteration_bounds = array<i64: 1, 1>, scalar_prefetch = 0 : i64, scratch_operands = 1 : i64, tpu.core_type = #tpu.core_type<tc>, window_params = [{transform_indices = @transform_0, window_bounds = array<i64: 16, 1>}, {pipeline_mode = #tpu.pipeline_mode<synchronous>, transform_indices = @transform_1, window_bounds = array<i64: 1, 128>}, {pipeline_mode = #tpu.pipeline_mode<synchronous>, transform_indices = @transform_2, window_bounds = array<i64: 256, 128>}, {pipeline_mode = #tpu.pipeline_mode<synchronous>, transform_indices = @transform_3, window_bounds = array<i64: 1, 128>}, {transform_indices = @transform_4, window_bounds = array<i64: 128, 128>}, {transform_indices = @transform_5, window_bounds = array<i64: 1, 128>}, {transform_indices = @transform_6, window_bounds = array<i64: 16, 128>}]} {
    %c0_i32 = arith.constant 0 : i32
    %0 = arith.cmpi eq, %arg1, %c0_i32 : i32
    %1 = arith.extui %0 : i1 to i32
    %c0_i32_0 = arith.constant 0 : i32
    %2 = arith.cmpi ne, %1, %c0_i32_0 : i32
    scf.if %2 {
      %c0_8 = arith.constant 0 : index
      %c0_9 = arith.constant 0 : index
      %10 = vector.load %arg2[%c0_8, %c0_9] : memref<16x1xf32, #tpu.memory_space<vmem>>, vector<16x1xf32>
      %c0_10 = arith.constant 0 : index
      %c0_11 = arith.constant 0 : index
      %11 = vector.load %arg3[%c0_10, %c0_11] : memref<1x128xf32, #tpu.memory_space<vmem>>, vector<1x128xf32>
      %12 = vector.broadcast %10 : vector<16x1xf32> to vector<16x128xf32>
      %13 = vector.broadcast %11 : vector<1x128xf32> to vector<16x128xf32>
      %14 = arith.mulf %12, %13 : vector<16x128xf32>
      %15 = math.cos %14 : vector<16x128xf32>
      %16 = math.sin %14 : vector<16x128xf32>
      %17 = tpu.concatenate %15, %16 in 1 : vector<16x128xf32>, vector<16x128xf32> -> vector<16x256xf32>
      %c0_12 = arith.constant 0 : index
      %c0_13 = arith.constant 0 : index
      %18 = vector.load %arg4[%c0_12, %c0_13] : memref<256x128xf32, #tpu.memory_space<vmem>>, vector<256x128xf32>
      %cst_14 = arith.constant dense<0.000000e+00> : vector<16x128xf32>
      %19 = tpu.matmul %17, %18, %cst_14 {dimension_numbers = #tpu.dot_dimension_numbers<[1], [0], [0], [1], [0, 0, 1, 1], [], []>} : vector<16x256xf32>, vector<256x128xf32>, vector<16x128xf32> -> vector<16x128xf32>
      %c0_15 = arith.constant 0 : index
      %c0_16 = arith.constant 0 : index
      %20 = vector.load %arg5[%c0_15, %c0_16] : memref<1x128xf32, #tpu.memory_space<vmem>>, vector<1x128xf32>
      %21 = vector.broadcast %20 : vector<1x128xf32> to vector<16x128xf32>
      %22 = arith.addf %19, %21 : vector<16x128xf32>
      %cst_17 = arith.constant 0.000000e+00 : f32
      %23 = vector.broadcast %cst_17 : f32 to vector<16x128xf32>
      %24 = arith.subf %23, %22 : vector<16x128xf32>
      %25 = math.exp %24 : vector<16x128xf32>
      %cst_18 = arith.constant 1.000000e+00 : f32
      %26 = vector.broadcast %cst_18 : f32 to vector<16x128xf32>
      %27 = arith.addf %26, %25 : vector<16x128xf32>
      %28 = tpu.reciprocal %27 : vector<16x128xf32> -> vector<16x128xf32>
      %29 = arith.mulf %22, %28 : vector<16x128xf32>
      %c0_19 = arith.constant 0 : index
      %c0_20 = arith.constant 0 : index
      %30 = vector.load %arg9[%c0_19, %c0_20] : memref<16x128xf32, #tpu.memory_space<vmem>>, vector<16x128xf32>
      tpu.vector_store %arg9[%c0_19, %c0_20], %29 {strides = array<i32>} : memref<16x128xf32, #tpu.memory_space<vmem>>, vector<16x128xf32>,
    } else {
    }
    %c0 = arith.constant 0 : index
    %c0_1 = arith.constant 0 : index
    %3 = vector.load %arg9[%c0, %c0_1] : memref<16x128xf32, #tpu.memory_space<vmem>>, vector<16x128xf32>
    %c0_2 = arith.constant 0 : index
    %c0_3 = arith.constant 0 : index
    %4 = vector.load %arg6[%c0_2, %c0_3] : memref<128x128xf32, #tpu.memory_space<vmem>>, vector<128x128xf32>
    %cst = arith.constant dense<0.000000e+00> : vector<16x128xf32>
    %5 = tpu.matmul %3, %4, %cst {dimension_numbers = #tpu.dot_dimension_numbers<[1], [0], [0], [1], [0, 0, 1, 1], [], []>} : vector<16x128xf32>, vector<128x128xf32>, vector<16x128xf32> -> vector<16x128xf32>
    %c0_4 = arith.constant 0 : index
    %c0_5 = arith.constant 0 : index
    %6 = vector.load %arg7[%c0_4, %c0_5] : memref<1x128xf32, #tpu.memory_space<vmem>>, vector<1x128xf32>
    %7 = vector.broadcast %6 : vector<1x128xf32> to vector<16x128xf32>
    %8 = arith.addf %5, %7 : vector<16x128xf32>
    %c0_6 = arith.constant 0 : index
    %c0_7 = arith.constant 0 : index
    %9 = vector.load %arg8[%c0_6, %c0_7] : memref<16x128xf32, #tpu.memory_space<vmem>>, vector<16x128xf32>
    tpu.vector_store %arg8[%c0_6, %c0_7], %8 {strides = array<i32>} : memref<16x128xf32, #tpu.memory_space<vmem>>, vector<16x128xf32>,
    return
  }
  func.func @transform_0(%arg0: i32, %arg1: i32) -> (i32, i32) {
    %c0_i32 = arith.constant 0 : i32
    %c0_i32_0 = arith.constant 0 : i32
    return %arg0, %c0_i32 : i32, i32
  }
  func.func @transform_1(%arg0: i32, %arg1: i32) -> (i32, i32) {
    %c0_i32 = arith.constant 0 : i32
    %c0_i32_0 = arith.constant 0 : i32
    %c0_i32_1 = arith.constant 0 : i32
    return %c0_i32, %c0_i32_0 : i32, i32
  }
  func.func @transform_2(%arg0: i32, %arg1: i32) -> (i32, i32) {
    %c0_i32 = arith.constant 0 : i32
    %c0_i32_0 = arith.constant 0 : i32
    %c0_i32_1 = arith.constant 0 : i32
    return %c0_i32, %c0_i32_0 : i32, i32
  }
  func.func @transform_3(%arg0: i32, %arg1: i32) -> (i32, i32) {
    %c0_i32 = arith.constant 0 : i32
    %c0_i32_0 = arith.constant 0 : i32
    %c0_i32_1 = arith.constant 0 : i32
    return %c0_i32, %c0_i32_0 : i32, i32
  }
  func.func @transform_4(%arg0: i32, %arg1: i32) -> (i32, i32) {
    %c0_i32 = arith.constant 0 : i32
    %c0_i32_0 = arith.constant 0 : i32
    return %c0_i32, %arg1 : i32, i32
  }
  func.func @transform_5(%arg0: i32, %arg1: i32) -> (i32, i32) {
    %c0_i32 = arith.constant 0 : i32
    %c0_i32_0 = arith.constant 0 : i32
    return %c0_i32, %arg1 : i32, i32
  }
  func.func @transform_6(%arg0: i32, %arg1: i32) -> (i32, i32) {
    %c0_i32 = arith.constant 0 : i32
    return %arg0, %arg1 : i32, i32
  }
}

</mosaic_0001>

<llo_original>
// kernel: timestep_embedder.1
$region0: #{timestep_embedder.1}
  #allocation0 [shape = 'u32[]', space=smem, size = 0x4, offset = 0x4, fixed_abs, tag = 'smem constant byte address 0x4 - core index']
  #allocation1 [shape = 'u32[144,128]{1,0:T(1,128)}', space=vmem, size = 0x12000, scoped, tag = 'internal scratch']
  #allocation2 [shape = 'f32[16,128]{1,0:T(8,128)}', space=vmem, size = 0x2000, scoped, tag = 'scratch operand']
  %s0 = inlined_call_operand.vmem [shape: f32[16,1], index: 0, kind: input, shape index: {}]
  %s1 = inlined_call_operand.vmem [shape: f32[1,128], index: 1, kind: input, shape index: {}]
  %s2 = inlined_call_operand.hbm [shape: f32[256,128], index: 2, kind: input, shape index: {}]
  %s3 = inlined_call_operand.vmem [shape: f32[1,128], index: 3, kind: input, shape index: {}]
  %s4 = inlined_call_operand.hbm [shape: f32[128,128], index: 4, kind: input, shape index: {}]
  %s5 = inlined_call_operand.vmem [shape: f32[1,128], index: 5, kind: input, shape index: {}]
  %s6 = inlined_call_operand.vmem [shape: f32[16,128], index: 6, kind: output, shape index: {}]
  %s7 = sld [smem:[#allocation0]]
  $region46: #{timestep_embedder.1} parent=0
    _
  %s9 = ssub.s32 1, %s7
  %s10 = scalar_select 0, %s9, %s7
  $region1: #{timestep_embedder.1} parent=0
    #allocation3 [shape = 'u8[131072]{0}', space=vmem, size = 0x20000, scoped, tag = 'input window, operand 2, single buffered']
    #allocation4 [shape = 's32[1]{0}', space=sflag, size = 0x4, scoped, tag = 'scoped memory for timestep_embedder.1']
    #allocation5 [shape = 'u8[65536]{0}', space=vmem, size = 0x10000, scoped, tag = 'input window, operand 4, single buffered']
    #allocation6 [shape = 's32[1]{0}', space=sflag, size = 0x4, scoped, tag = 'scoped memory for timestep_embedder.1']
    %11 = vsyncpa [#allocation4], 0
    %12 = vsyncpa [#allocation6], 0
    // Predicated region
    $region2: #{timestep_embedder.1} parent=1 // pred_check
      _
    $region3: #{timestep_embedder.1} parent=1 // pred_check_branch
      %14 = sbr.rel (0) target = $region5
    $region4: #{timestep_embedder.1} parent=1 // pred_region
      _
    $region5: #{timestep_embedder.1} parent=1 // pred_fallthru
      _
    // Predicated region
    $region6: #{timestep_embedder.1} parent=1 // pred_check
      _
    $region7: #{timestep_embedder.1} parent=1 // pred_check_branch
      %16 = sbr.rel (0) target = $region9
    $region8: #{timestep_embedder.1} parent=1 // pred_region
      _
    $region9: #{timestep_embedder.1} parent=1 // pred_fallthru
      _
    // Predicated region
    $region10: #{timestep_embedder.1} parent=1 // pred_check
      _
    $region11: #{timestep_embedder.1} parent=1 // pred_check_branch
      %18 = sbr.rel (0) target = $region13
    $region12: #{timestep_embedder.1} parent=1 // pred_region
      %s20 = ssub.s32 4096, 4096
      %21 = vsyncadd [#allocation4], %s20
      %s22 = sshll.u32 [#allocation3], 4
      %s23 = int_to_ptr.vmem [resolvable:$true] %s22
      %28 = dma.hbm_to_vmem [thread:$0]  %s2, 4096, %s23, [#allocation4], 128, 128, 8
    $region13: #{timestep_embedder.1} parent=1 // pred_fallthru
      _
    // Predicated region
    $region14: #{timestep_embedder.1} parent=1 // pred_check
      _
    $region15: #{timestep_embedder.1} parent=1 // pred_check_branch
      %30 = sbr.rel (0) target = $region17
    $region16: #{timestep_embedder.1} parent=1 // pred_region
      _
    $region17: #{timestep_embedder.1} parent=1 // pred_fallthru
      _
    // Predicated region
    $region18: #{timestep_embedder.1} parent=1 // pred_check
      _
    $region19: #{timestep_embedder.1} parent=1 // pred_check_branch
      %32 = sbr.rel (0) target = $region21
    $region20: #{timestep_embedder.1} parent=1 // pred_region
      %s34 = ssub.s32 2048, 2048
      %35 = vsyncadd [#allocation6], %s34
      %s36 = sshll.u32 [#allocation5], 4
      %s37 = int_to_ptr.vmem [resolvable:$true] %s36
      %42 = dma.hbm_to_vmem [thread:$0]  %s4, 2048, %s37, [#allocation6], 128, 128, 8
    $region21: #{timestep_embedder.1} parent=1 // pred_fallthru
      _
    // Predicated region
    $region22: #{timestep_embedder.1} parent=1 // pred_check
      _
    $region23: #{timestep_embedder.1} parent=1 // pred_check_branch
      %44 = sbr.rel (0) target = $region25
    $region24: #{timestep_embedder.1} parent=1 // pred_region
      _
    $region25: #{timestep_embedder.1} parent=1 // pred_fallthru
      _
    // Predicated region
    $region26: #{timestep_embedder.1} parent=1 // pred_check
      _
    $region27: #{timestep_embedder.1} parent=1 // pred_check_branch
      %46 = sbr.rel (0) target = $region29
    $region28: #{timestep_embedder.1} parent=1 // pred_region
      %47 = dma.done [#allocation4], 4096
    $region29: #{timestep_embedder.1} parent=1 // pred_fallthru
      _
    // Predicated region
    $region30: #{timestep_embedder.1} parent=1 // pred_check
      _
    $region31: #{timestep_embedder.1} parent=1 // pred_check_branch
      %49 = sbr.rel (0) target = $region33
    $region32: #{timestep_embedder.1} parent=1 // pred_region
      %50 = dma.done [#allocation6], 2048
    $region33: #{timestep_embedder.1} parent=1 // pred_fallthru
      _
    %p51 = scmp.eq.s32.totalorder 0, 0
    // Predicated region
    $region34: #{timestep_embedder.1} parent=1 // pred_check
      %p52 = pneg %p51
    $region35: #{timestep_embedder.1} parent=1 // pred_check_branch
      %54 = sbr.rel (%p52) target = $region37
    $region36: #{timestep_embedder.1} parent=1 // pred_region
      %v55 = vld [vmem:[%s0] sm:$0xff]
      %v56 = vld [vmem:[%s0 + $0x8] sm:$0xff]
      %v57 = vld [vmem:[%s1] sm:$0x1]
      %59 = vset.pattern.permute.xlu0 0
      %60 = vperm.xlu0 %59, %v55
      %v61 = vpop.permute.xlu0 %60
      %64 = vset.pattern.permute.xlu0 0
      %65 = vperm.xlu0 %64, %v56
      %v66 = vpop.permute.xlu0 %65
      %v69 = vlaneseq
      %v70 = vshrl.u32 %v69, 7
      %v71 = vsub.s32 0, %v70
      %v72 = vrot.slane %v57, %v71
      %v74 = vmul.f32 %v61, %v72
      %v75 = vmul.f32 %v66, %v72
      %v76 = vand.u32 2147483647, %v74
      %vm77 = vcmp.le.f32.partialorder %v76, 0.7853982
      %vm78 = vcmp.lt.s32.totalorder %v74, 0
      %v79 = vand.u32 %v74, 2139095040
      %v80 = vshrl.u32 %v79, 23
      %v81 = vsub.s32 %v80, 127
      %v82 = vand.u32 2147483647, %v74
      %v83 = vand.u32 %v82, 8388607
      %v84 = vor.u32 %v83, 8388608
      %v85 = vsub.s32 0, %v84
      %v86 = vadd.s32 %v81, 1
      %vm87 = vcmp.gt.s32.totalorder %v86, 0
      %v88 = vsel %vm87, %v86, 0
      %v89 = vshrl.u32 %v88, 5
      %v90 = vand.u32 %v88, 31
      %v91 = vsub.s32 32, %v90
      %v92 = vshrl.u32 683565275, %v91
      %v93 = vshll.u32 683565275, %v90
      %v94 = vshrl.u32 2475754826, %v91
      %v95 = vor.u32 %v93, %v94
      %v96 = vshll.u32 2475754826, %v90
      %v97 = vshrl.u32 2131351028, %v91
      %v98 = vor.u32 %v96, %v97
      %v99 = vshll.u32 2131351028, %v90
      %v100 = vshrl.u32 2102212464, %v91
      %v101 = vor.u32 %v99, %v100
      %v102 = vshll.u32 2102212464, %v90
      %v103 = vshrl.u32 920167782, %v91
      %v104 = vor.u32 %v102, %v103
      %v105 = vshll.u32 920167782, %v90
      %v106 = vshrl.u32 1326507024, %v91
      %v107 = vor.u32 %v105, %v106
      %vm108 = vcmp.lt.s32.totalorder %v89, 1
      %vm109 = vcmp.lt.s32.totalorder %v89, 2
      %vm110 = vcmp.lt.s32.totalorder %v89, 3
      %vm111 = vcmp.lt.s32.totalorder %v89, 4
      %v112 = vsel %vm108, %v92, %v95
      %v113 = vsel %vm111, %v101, 2102212464
      %v114 = vsel %vm110, %v98, %v113
      %v115 = vsel %vm109, %v112, %v114
      %v116 = vsel %vm108, %v95, %v98
      %v117 = vsel %vm111, %v104, 920167782
      %v118 = vsel %vm110, %v101, %v117
      %v119 = vsel %vm109, %v116, %v118
      %v120 = vsel %vm108, %v98, %v101
      %v121 = vsel %vm111, %v107, 1326507024
      %v122 = vsel %vm110, %v104, %v121
      %v123 = vsel %vm109, %v120, %v122
      %v124 = vshll.u32 %v84, 8
      %v125 = vmul.u32.u64.compose %v124, %v123
      %v126 = vextract.low.u32 %v125
      %v127 = vextract.high.u32 %v125
      %v128 = vmul.u32.u64.compose %v124, %v119
      %v129 = vextract.low.u32 %v128
      %v130 = vextract.high.u32 %v128
      %v131 = vmul.u32 %v124, %v115
      %v132 = vadd.s32 %v127, %v129
      %vm133 = vc.u32 %v127, %v129
      %v134 = vadd.s32 %v130, 1
      %v135 = vsel %vm133, %v134, %v130
      %v136 = vadd.s32 %v131, %v135
      %v137 = vadd.s32 %v136, 536870912
      %v138 = vshrl.u32 %v137, 30
      %v139 = vshll.u32 %v138, 30
      %v140 = vsub.s32 %v136, %v139
      %vm141 = vcmp.lt.s32.totalorder %v140, 0
      %v142 = vsub.s32 0, %v140
      %v143 = vsel %vm141, %v142, %v140
      %v144 = vclz %v143
      %v145 = vsub.s32 %v144, 2
      %vm146 = vcmp.gt.s32.totalorder 0, %v145
      %v147 = vsel %vm146, 0, %v145
      %v148 = vsub.s32 32, %v147
      %v149 = vshll.u32 %v140, %v147
      %v150 = vshrl.u32 %v132, %v148
      %v151 = vor.u32 %v149, %v150
      %v152 = vsub.s32 4294967266, %v147
      %v153 = vadd.s32 %v152, 127
      %v154 = vshll.u32 %v153, 23
      %v155 = vor.u32 4788187, %v154
      %v156 = vand.u32 2147483647, %v155
      %v158 = vcvt.s32.f32 %v151
      %v159 = vmul.f32 %v158, %v156
      %v160 = vxor.u32 %v159, 2147483648
      %v161 = vsel %vm78, %v160, %v159
      %v162 = vsub.s32 4, %v138
      %v163 = vsel %vm78, %v162, %v138
      %v164 = vsel %vm77, %v74, %v161
      %v165 = vsel %vm77, 0, %v163
      %v166 = vcosq.f32.pop %v164
      %v167 = vsinq.f32.pop %v164
      %vm168 = vweird.f32 %v74
      %v169 = vand.u32 %v165, 3
      %vm170 = vcmp.lt.s32.totalorder %v169, 2
      %vm171 = vcmp.eq.s32.totalorder %v169, 0
      %v172 = vxor.u32 %v167, 2147483648
      %v173 = vsel %vm171, %v166, %v172
      %vm174 = vcmp.eq.s32.totalorder %v169, 2
      %v175 = vxor.u32 %v166, 2147483648
      %v176 = vsel %vm174, %v175, %v167
      %v177 = vsel %vm170, %v173, %v176
      %v178 = vsel %vm168, nan, %v177
      %v179 = vand.u32 2147483647, %v75
      %vm180 = vcmp.le.f32.partialorder %v179, 0.7853982
      %vm181 = vcmp.lt.s32.totalorder %v75, 0
      %v182 = vand.u32 %v75, 2139095040
      %v183 = vshrl.u32 %v182, 23
      %v184 = vsub.s32 %v183, 127
      %v185 = vand.u32 2147483647, %v75
      %v186 = vand.u32 %v185, 8388607
      %v187 = vor.u32 %v186, 8388608
      %v188 = vsub.s32 0, %v187
      %v189 = vadd.s32 %v184, 1
      %vm190 = vcmp.gt.s32.totalorder %v189, 0
      %v191 = vsel %vm190, %v189, 0
      %v192 = vshrl.u32 %v191, 5
      %v193 = vand.u32 %v191, 31
      %v194 = vsub.s32 32, %v193
      %v195 = vshrl.u32 683565275, %v194
      %v196 = vshll.u32 683565275, %v193
      %v197 = vshrl.u32 2475754826, %v194
      %v198 = vor.u32 %v196, %v197
      %v199 = vshll.u32 2475754826, %v193
      %v200 = vshrl.u32 2131351028, %v194
      %v201 = vor.u32 %v199, %v200
      %v202 = vshll.u32 2131351028, %v193
      %v203 = vshrl.u32 2102212464, %v194
      %v204 = vor.u32 %v202, %v203
      %v205 = vshll.u32 2102212464, %v193
      %v206 = vshrl.u32 920167782, %v194
      %v207 = vor.u32 %v205, %v206
      %v208 = vshll.u32 920167782, %v193
      %v209 = vshrl.u32 1326507024, %v194
      %v210 = vor.u32 %v208, %v209
      %vm211 = vcmp.lt.s32.totalorder %v192, 1
      %vm212 = vcmp.lt.s32.totalorder %v192, 2
      %vm213 = vcmp.lt.s32.totalorder %v192, 3
      %vm214 = vcmp.lt.s32.totalorder %v192, 4
      %v215 = vsel %vm211, %v195, %v198
      %v216 = vsel %vm214, %v204, 2102212464
      %v217 = vsel %vm213, %v201, %v216
      %v218 = vsel %vm212, %v215, %v217
      %v219 = vsel %vm211, %v198, %v201
      %v220 = vsel %vm214, %v207, 920167782
      %v221 = vsel %vm213, %v204, %v220
      %v222 = vsel %vm212, %v219, %v221
      %v223 = vsel %vm211, %v201, %v204
      %v224 = vsel %vm214, %v210, 1326507024
      %v225 = vsel %vm213, %v207, %v224
      %v226 = vsel %vm212, %v223, %v225
      %v227 = vshll.u32 %v187, 8
      %v228 = vmul.u32.u64.compose %v227, %v226
      %v229 = vextract.low.u32 %v228
      %v230 = vextract.high.u32 %v228
      %v231 = vmul.u32.u64.compose %v227, %v222
      %v232 = vextract.low.u32 %v231
      %v233 = vextract.high.u32 %v231
      %v234 = vmul.u32 %v227, %v218
      %v235 = vadd.s32 %v230, %v232
      %vm236 = vc.u32 %v230, %v232
      %v237 = vadd.s32 %v233, 1
      %v238 = vsel %vm236, %v237, %v233
      %v239 = vadd.s32 %v234, %v238
      %v240 = vadd.s32 %v239, 536870912
      %v241 = vshrl.u32 %v240, 30
      %v242 = vshll.u32 %v241, 30
      %v243 = vsub.s32 %v239, %v242
      %vm244 = vcmp.lt.s32.totalorder %v243, 0
      %v245 = vsub.s32 0, %v243
      %v246 = vsel %vm244, %v245, %v243
      %v247 = vclz %v246
      %v248 = vsub.s32 %v247, 2
      %vm249 = vcmp.gt.s32.totalorder 0, %v248
      %v250 = vsel %vm249, 0, %v248
      %v251 = vsub.s32 32, %v250
      %v252 = vshll.u32 %v243, %v250
      %v253 = vshrl.u32 %v235, %v251
      %v254 = vor.u32 %v252, %v253
      %v255 = vsub.s32 4294967266, %v250
      %v256 = vadd.s32 %v255, 127
      %v257 = vshll.u32 %v256, 23
      %v258 = vor.u32 4788187, %v257
      %v259 = vand.u32 2147483647, %v258
      %v261 = vcvt.s32.f32 %v254
      %v262 = vmul.f32 %v261, %v259
      %v263 = vxor.u32 %v262, 2147483648
      %v264 = vsel %vm181, %v263, %v262
      %v265 = vsub.s32 4, %v241
      %v266 = vsel %vm181, %v265, %v241
      %v267 = vsel %vm180, %v75, %v264
      %v268 = vsel %vm180, 0, %v266
      %v269 = vcosq.f32.pop %v267
      %v270 = vsinq.f32.pop %v267
      %vm271 = vweird.f32 %v75
      %v272 = vand.u32 %v268, 3
      %vm273 = vcmp.lt.s32.totalorder %v272, 2
      %vm274 = vcmp.eq.s32.totalorder %v272, 0
      %v275 = vxor.u32 %v270, 2147483648
      %v276 = vsel %vm274, %v269, %v275
      %vm277 = vcmp.eq.s32.totalorder %v272, 2
      %v278 = vxor.u32 %v269, 2147483648
      %v279 = vsel %vm277, %v278, %v270
      %v280 = vsel %vm273, %v276, %v279
      %v281 = vsel %vm271, nan, %v280
      %v282 = vand.u32 2147483647, %v74
      %vm283 = vcmp.le.f32.partialorder %v282, 0.7853982
      %vm284 = vcmp.lt.s32.totalorder %v74, 0
      %v285 = vand.u32 %v74, 2139095040
      %v286 = vshrl.u32 %v285, 23
      %v287 = vsub.s32 %v286, 127
      %v288 = vand.u32 2147483647, %v74
      %v289 = vand.u32 %v288, 8388607
      %v290 = vor.u32 %v289, 8388608
      %v291 = vsub.s32 0, %v290
      %v292 = vadd.s32 %v287, 1
      %vm293 = vcmp.gt.s32.totalorder %v292, 0
      %v294 = vsel %vm293, %v292, 0
      %v295 = vshrl.u32 %v294, 5
      %v296 = vand.u32 %v294, 31
      %v297 = vsub.s32 32, %v296
      %v298 = vshrl.u32 683565275, %v297
      %v299 = vshll.u32 683565275, %v296
      %v300 = vshrl.u32 2475754826, %v297
      %v301 = vor.u32 %v299, %v300
      %v302 = vshll.u32 2475754826, %v296
      %v303 = vshrl.u32 2131351028, %v297
      %v304 = vor.u32 %v302, %v303
      %v305 = vshll.u32 2131351028, %v296
      %v306 = vshrl.u32 2102212464, %v297
      %v307 = vor.u32 %v305, %v306
      %v308 = vshll.u32 2102212464, %v296
      %v309 = vshrl.u32 920167782, %v297
      %v310 = vor.u32 %v308, %v309
      %v311 = vshll.u32 920167782, %v296
      %v312 = vshrl.u32 1326507024, %v297
      %v313 = vor.u32 %v311, %v312
      %vm314 = vcmp.lt.s32.totalorder %v295, 1
      %vm315 = vcmp.lt.s32.totalorder %v295, 2
      %vm316 = vcmp.lt.s32.totalorder %v295, 3
      %vm317 = vcmp.lt.s32.totalorder %v295, 4
      %v318 = vsel %vm314, %v298, %v301
      %v319 = vsel %vm317, %v307, 2102212464
      %v320 = vsel %vm316, %v304, %v319
      %v321 = vsel %vm315, %v318, %v320
      %v322 = vsel %vm314, %v301, %v304
      %v323 = vsel %vm317, %v310, 920167782
      %v324 = vsel %vm316, %v307, %v323
      %v325 = vsel %vm315, %v322, %v324
      %v326 = vsel %vm314, %v304, %v307
      %v327 = vsel %vm317, %v313, 1326507024
      %v328 = vsel %vm316, %v310, %v327
      %v329 = vsel %vm315, %v326, %v328
      %v330 = vshll.u32 %v290, 8
      %v331 = vmul.u32.u64.compose %v330, %v329
      %v332 = vextract.low.u32 %v331
      %v333 = vextract.high.u32 %v331
      %v334 = vmul.u32.u64.compose %v330, %v325
      %v335 = vextract.low.u32 %v334
      %v336 = vextract.high.u32 %v334
      %v337 = vmul.u32 %v330, %v321
      %v338 = vadd.s32 %v333, %v335
      %vm339 = vc.u32 %v333, %v335
      %v340 = vadd.s32 %v336, 1
      %v341 = vsel %vm339, %v340, %v336
      %v342 = vadd.s32 %v337, %v341
      %v343 = vadd.s32 %v342, 536870912
      %v344 = vshrl.u32 %v343, 30
      %v345 = vshll.u32 %v344, 30
      %v346 = vsub.s32 %v342, %v345
      %vm347 = vcmp.lt.s32.totalorder %v346, 0
      %v348 = vsub.s32 0, %v346
      %v349 = vsel %vm347, %v348, %v346
      %v350 = vclz %v349
      %v351 = vsub.s32 %v350, 2
      %vm352 = vcmp.gt.s32.totalorder 0, %v351
      %v353 = vsel %vm352, 0, %v351
      %v354 = vsub.s32 32, %v353
      %v355 = vshll.u32 %v346, %v353
      %v356 = vshrl.u32 %v338, %v354
      %v357 = vor.u32 %v355, %v356
      %v358 = vsub.s32 4294967266, %v353
      %v359 = vadd.s32 %v358, 127
      %v360 = vshll.u32 %v359, 23
      %v361 = vor.u32 4788187, %v360
      %v362 = vand.u32 2147483647, %v361
      %v364 = vcvt.s32.f32 %v357
      %v365 = vmul.f32 %v364, %v362
      %v366 = vxor.u32 %v365, 2147483648
      %v367 = vsel %vm284, %v366, %v365
      %v368 = vsub.s32 4, %v344
      %v369 = vsel %vm284, %v368, %v344
      %v370 = vsel %vm283, %v74, %v367
      %v371 = vsel %vm283, 0, %v369
      %v372 = vcosq.f32.pop %v370
      %v373 = vsinq.f32.pop %v370
      %vm374 = vweird.f32 %v74
      %v375 = vadd.s32 %v371, 3
      %v376 = vand.u32 %v375, 3
      %vm377 = vcmp.lt.s32.totalorder %v376, 2
      %vm378 = vcmp.eq.s32.totalorder %v376, 0
      %v379 = vxor.u32 %v373, 2147483648
      %v380 = vsel %vm378, %v372, %v379
      %vm381 = vcmp.eq.s32.totalorder %v376, 2
      %v382 = vxor.u32 %v372, 2147483648
      %v383 = vsel %vm381, %v382, %v373
      %v384 = vsel %vm377, %v380, %v383
      %v385 = vsel %vm374, nan, %v384
      %v386 = vand.u32 2147483647, %v75
      %vm387 = vcmp.le.f32.partialorder %v386, 0.7853982
      %vm388 = vcmp.lt.s32.totalorder %v75, 0
      %v389 = vand.u32 %v75, 2139095040
      %v390 = vshrl.u32 %v389, 23
      %v391 = vsub.s32 %v390, 127
      %v392 = vand.u32 2147483647, %v75
      %v393 = vand.u32 %v392, 8388607
      %v394 = vor.u32 %v393, 8388608
      %v395 = vsub.s32 0, %v394
      %v396 = vadd.s32 %v391, 1
      %vm397 = vcmp.gt.s32.totalorder %v396, 0
      %v398 = vsel %vm397, %v396, 0
      %v399 = vshrl.u32 %v398, 5
      %v400 = vand.u32 %v398, 31
      %v401 = vsub.s32 32, %v400
      %v402 = vshrl.u32 683565275, %v401
      %v403 = vshll.u32 683565275, %v400
      %v404 = vshrl.u32 2475754826, %v401
      %v405 = vor.u32 %v403, %v404
      %v406 = vshll.u32 2475754826, %v400
      %v407 = vshrl.u32 2131351028, %v401
      %v408 = vor.u32 %v406, %v407
      %v409 = vshll.u32 2131351028, %v400
      %v410 = vshrl.u32 2102212464, %v401
      %v411 = vor.u32 %v409, %v410
      %v412 = vshll.u32 2102212464, %v400
      %v413 = vshrl.u32 920167782, %v401
      %v414 = vor.u32 %v412, %v413
      %v415 = vshll.u32 920167782, %v400
      %v416 = vshrl.u32 1326507024, %v401
      %v417 = vor.u32 %v415, %v416
      %vm418 = vcmp.lt.s32.totalorder %v399, 1
      %vm419 = vcmp.lt.s32.totalorder %v399, 2
      %vm420 = vcmp.lt.s32.totalorder %v399, 3
      %vm421 = vcmp.lt.s32.totalorder %v399, 4
      %v422 = vsel %vm418, %v402, %v405
      %v423 = vsel %vm421, %v411, 2102212464
      %v424 = vsel %vm420, %v408, %v423
      %v425 = vsel %vm419, %v422, %v424
      %v426 = vsel %vm418, %v405, %v408
      %v427 = vsel %vm421, %v414, 920167782
      %v428 = vsel %vm420, %v411, %v427
      %v429 = vsel %vm419, %v426, %v428
      %v430 = vsel %vm418, %v408, %v411
      %v431 = vsel %vm421, %v417, 1326507024
      %v432 = vsel %vm420, %v414, %v431
      %v433 = vsel %vm419, %v430, %v432
      %v434 = vshll.u32 %v394, 8
      %v435 = vmul.u32.u64.compose %v434, %v433
      %v436 = vextract.low.u32 %v435
      %v437 = vextract.high.u32 %v435
      %v438 = vmul.u32.u64.compose %v434, %v429
      %v439 = vextract.low.u32 %v438
      %v440 = vextract.high.u32 %v438
      %v441 = vmul.u32 %v434, %v425
      %v442 = vadd.s32 %v437, %v439
      %vm443 = vc.u32 %v437, %v439
      %v444 = vadd.s32 %v440, 1
      %v445 = vsel %vm443, %v444, %v440
      %v446 = vadd.s32 %v441, %v445
      %v447 = vadd.s32 %v446, 536870912
      %v448 = vshrl.u32 %v447, 30
      %v449 = vshll.u32 %v448, 30
      %v450 = vsub.s32 %v446, %v449
      %vm451 = vcmp.lt.s32.totalorder %v450, 0
      %v452 = vsub.s32 0, %v450
      %v453 = vsel %vm451, %v452, %v450
      %v454 = vclz %v453
      %v455 = vsub.s32 %v454, 2
      %vm456 = vcmp.gt.s32.totalorder 0, %v455
      %v457 = vsel %vm456, 0, %v455
      %v458 = vsub.s32 32, %v457
      %v459 = vshll.u32 %v450, %v457
      %v460 = vshrl.u32 %v442, %v458
      %v461 = vor.u32 %v459, %v460
      %v462 = vsub.s32 4294967266, %v457
      %v463 = vadd.s32 %v462, 127
      %v464 = vshll.u32 %v463, 23
      %v465 = vor.u32 4788187, %v464
      %v466 = vand.u32 2147483647, %v465
      %v468 = vcvt.s32.f32 %v461
      %v469 = vmul.f32 %v468, %v466
      %v470 = vxor.u32 %v469, 2147483648
      %v471 = vsel %vm388, %v470, %v469
      %v472 = vsub.s32 4, %v448
      %v473 = vsel %vm388, %v472, %v448
      %v474 = vsel %vm387, %v75, %v471
      %v475 = vsel %vm387, 0, %v473
      %v476 = vcosq.f32.pop %v474
      %v477 = vsinq.f32.pop %v474
      %vm478 = vweird.f32 %v75
      %v479 = vadd.s32 %v475, 3
      %v480 = vand.u32 %v479, 3
      %vm481 = vcmp.lt.s32.totalorder %v480, 2
      %vm482 = vcmp.eq.s32.totalorder %v480, 0
      %v483 = vxor.u32 %v477, 2147483648
      %v484 = vsel %vm482, %v476, %v483
      %vm485 = vcmp.eq.s32.totalorder %v480, 2
      %v486 = vxor.u32 %v476, 2147483648
      %v487 = vsel %vm485, %v486, %v477
      %v488 = vsel %vm481, %v484, %v487
      %v489 = vsel %vm478, nan, %v488
      %v490 = vld [vmem:[#allocation3] sm:$0xff]
      %v491 = vld [vmem:[#allocation3 + $0x8] sm:$0xff]
      %v492 = vld [vmem:[#allocation3 + $0x10] sm:$0xff]
      %v493 = vld [vmem:[#allocation3 + $0x18] sm:$0xff]
      %v494 = vld [vmem:[#allocation3 + $0x20] sm:$0xff]
      %v495 = vld [vmem:[#allocation3 + $0x28] sm:$0xff]
      %v496 = vld [vmem:[#allocation3 + $0x30] sm:$0xff]
      %v497 = vld [vmem:[#allocation3 + $0x38] sm:$0xff]
      %v498 = vld [vmem:[#allocation3 + $0x40] sm:$0xff]
      %v499 = vld [vmem:[#allocation3 + $0x48] sm:$0xff]
      %v500 = vld [vmem:[#allocation3 + $0x50] sm:$0xff]
      %v501 = vld [vmem:[#allocation3 + $0x58] sm:$0xff]
      %v502 = vld [vmem:[#allocation3 + $0x60] sm:$0xff]
      %v503 = vld [vmem:[#allocation3 + $0x68] sm:$0xff]
      %v504 = vld [vmem:[#allocation3 + $0x70] sm:$0xff]
      %v505 = vld [vmem:[#allocation3 + $0x78] sm:$0xff]
      %v506 = vld [vmem:[#allocation3 + $0x80] sm:$0xff]
      %v507 = vld [vmem:[#allocation3 + $0x88] sm:$0xff]
      %v508 = vld [vmem:[#allocation3 + $0x90] sm:$0xff]
      %v509 = vld [vmem:[#allocation3 + $0x98] sm:$0xff]
      %v510 = vld [vmem:[#allocation3 + $0xa0] sm:$0xff]
      %v511 = vld [vmem:[#allocation3 + $0xa8] sm:$0xff]
      %v512 = vld [vmem:[#allocation3 + $0xb0] sm:$0xff]
      %v513 = vld [vmem:[#allocation3 + $0xb8] sm:$0xff]
      %v514 = vld [vmem:[#allocation3 + $0xc0] sm:$0xff]
      %v515 = vld [vmem:[#allocation3 + $0xc8] sm:$0xff]
      %v516 = vld [vmem:[#allocation3 + $0xd0] sm:$0xff]
      %v517 = vld [vmem:[#allocation3 + $0xd8] sm:$0xff]
      %v518 = vld [vmem:[#allocation3 + $0xe0] sm:$0xff]
      %v519 = vld [vmem:[#allocation3 + $0xe8] sm:$0xff]
      %v520 = vld [vmem:[#allocation3 + $0xf0] sm:$0xff]
      %v521 = vld [vmem:[#allocation3 + $0xf8] sm:$0xff]
      %v522 = vld [vmem:[%s3] sm:$0x1]
      %v524 = vlaneseq
      %v525 = vshrl.u32 %v524, 7
      %v526 = vsub.s32 0, %v525
      %v527 = vrot.slane %v522, %v526
      %529 = vmatprep.subr.mxu0 0.0
      %530 = vmatpush1.msra.mxu0 %v490
      %531 = vmatprep.subr.mxu0 0.0
      %532 = vmatpush1.msra.mxu0 %v491
      %533 = vmatprep.subr.mxu0 0.0
      %534 = vmatpush1.msra.mxu0 %v492
      %535 = vmatprep.subr.mxu0 0.0
      %536 = vmatpush1.msra.mxu0 %v493
      %537 = vmatprep.subr.mxu0 0.0
      %538 = vmatpush1.msra.mxu0 %v494
      %539 = vmatprep.subr.mxu0 0.0
      %540 = vmatpush1.msra.mxu0 %v495
      %541 = vmatprep.subr.mxu0 0.0
      %542 = vmatpush1.msra.mxu0 %v496
      %543 = vmatprep.subr.mxu0 0.0
      %544 = vmatpush1.msra.mxu0 %v497
      %545 = vmatprep.subr.mxu0 0.0
      %546 = vmatpush1.msra.mxu0 %v498
      %547 = vmatprep.subr.mxu0 0.0
      %548 = vmatpush1.msra.mxu0 %v499
      %549 = vmatprep.subr.mxu0 0.0
      %550 = vmatpush1.msra.mxu0 %v500
      %551 = vmatprep.subr.mxu0 0.0
      %552 = vmatpush1.msra.mxu0 %v501
      %553 = vmatprep.subr.mxu0 0.0
      %554 = vmatpush1.msra.mxu0 %v502
      %555 = vmatprep.subr.mxu0 0.0
      %556 = vmatpush1.msra.mxu0 %v503
      %557 = vmatprep.subr.mxu0 0.0
      %558 = vmatpush1.msra.mxu0 %v504
      %559 = vmatprep.subr.mxu0 0.0
      %560 = vmatpush1.msra.mxu0 %v505
      %561 = vmatprep.subr.mxu0 0.0
      %562 = vmatpush1.msra.mxu0 %v506
      %563 = vmatprep.subr.mxu0 0.0
      %564 = vmatpush1.msra.mxu0 %v507
      %565 = vmatprep.subr.mxu0 0.0
      %566 = vmatpush1.msra.mxu0 %v508
      %567 = vmatprep.subr.mxu0 0.0
      %568 = vmatpush1.msra.mxu0 %v509
      %569 = vmatprep.subr.mxu0 0.0
      %570 = vmatpush1.msra.mxu0 %v510
      %571 = vmatprep.subr.mxu0 0.0
      %572 = vmatpush1.msra.mxu0 %v511
      %573 = vmatprep.subr.mxu0 0.0
      %574 = vmatpush1.msra.mxu0 %v512
      %575 = vmatprep.subr.mxu0 0.0
      %576 = vmatpush1.msra.mxu0 %v513
      %577 = vmatprep.subr.mxu0 0.0
      %578 = vmatpush1.msra.mxu0 %v514
      %579 = vmatprep.subr.mxu0 0.0
      %580 = vmatpush1.msra.mxu0 %v515
      %581 = vmatprep.subr.mxu0 0.0
      %582 = vmatpush1.msra.mxu0 %v516
      %583 = vmatprep.subr.mxu0 0.0
      %584 = vmatpush1.msra.mxu0 %v517
      %585 = vmatprep.subr.mxu0 0.0
      %586 = vmatpush1.msra.mxu0 %v518
      %587 = vmatprep.subr.mxu0 0.0
      %588 = vmatpush1.msra.mxu0 %v519
      %589 = vmatprep.subr.mxu0 0.0
      %590 = vmatpush1.msra.mxu0 %v520
      %591 = vmatprep.subr.mxu0 0.0
      %592 = vmatpush1.msra.mxu0 %v521
      %593 = vmatprep.mubr.f32.mxu0 %v385
      %594 = vmatmul.mubr.f32.gmra.mrb[0].mxu0 %v178
      %v595 = vpop.f32.mrb[0].mxu0
      %v596 = vadd.f32 %v527, %v595
      %v597 = vpop.f32.mrb[0].mxu0
      %598 = vmatprep.mubr.f32.mxu0 %v489
      %599 = vmatmul.mubr.f32.gmra.mrb[0].mxu0 %v281
      %v600 = vpop.f32.mrb[0].mxu0
      %v601 = vadd.f32 %v527, %v600
      %v602 = vpop.f32.mrb[0].mxu0
      %603 = vdwg.mxu0
      %v604 = vsub.f32 0.0, %v596
      %v605 = vsub.f32 0.0, %v601
      %v606 = vmul.f32 %v604, 1.442695
      %v607 = vpow.pop %v606
      %v608 = vmul.f32 %v605, 1.442695
      %v609 = vpow.pop %v608
      %v610 = vadd.f32 %v607, 1.0
      %v611 = vadd.f32 %v609, 1.0
      %v612 = vrcp.pop %v610
      %v613 = vrcp.pop %v611
      %v614 = vmul.f32 %v596, %v612
      %v615 = vmul.f32 %v601, %v613
      %616 = vst [vmem:[#allocation2] sm:$0xff] %v614
      %617 = vst [vmem:[#allocation2 + $0x8] sm:$0xff] %v615
    $region37: #{timestep_embedder.1} parent=1 // pred_fallthru
      _
    %v618 = vld [vmem:[#allocation2] sm:$0xff]
    %v619 = vld [vmem:[#allocation2 + $0x8] sm:$0xff]
    %v620 = vld [vmem:[#allocation5] sm:$0xff]
    %v621 = vld [vmem:[#allocation5 + $0x8] sm:$0xff]
    %v622 = vld [vmem:[#allocation5 + $0x10] sm:$0xff]
    %v623 = vld [vmem:[#allocation5 + $0x18] sm:$0xff]
    %v624 = vld [vmem:[#allocation5 + $0x20] sm:$0xff]
    %v625 = vld [vmem:[#allocation5 + $0x28] sm:$0xff]
    %v626 = vld [vmem:[#allocation5 + $0x30] sm:$0xff]
    %v627 = vld [vmem:[#allocation5 + $0x38] sm:$0xff]
    %v628 = vld [vmem:[#allocation5 + $0x40] sm:$0xff]
    %v629 = vld [vmem:[#allocation5 + $0x48] sm:$0xff]
    %v630 = vld [vmem:[#allocation5 + $0x50] sm:$0xff]
    %v631 = vld [vmem:[#allocation5 + $0x58] sm:$0xff]
    %v632 = vld [vmem:[#allocation5 + $0x60] sm:$0xff]
    %v633 = vld [vmem:[#allocation5 + $0x68] sm:$0xff]
    %v634 = vld [vmem:[#allocation5 + $0x70] sm:$0xff]
    %v635 = vld [vmem:[#allocation5 + $0x78] sm:$0xff]
    %v636 = vld [vmem:[%s5] sm:$0x1]
    %v638 = vlaneseq
    %v639 = vshrl.u32 %v638, 7
    %v640 = vsub.s32 0, %v639
    %v641 = vrot.slane %v636, %v640
    %643 = vmatprep.subr.mxu0 0.0
    %644 = vmatpush1.msra.mxu0 %v620
    %645 = vmatprep.subr.mxu0 0.0
    %646 = vmatpush1.msra.mxu0 %v621
    %647 = vmatprep.subr.mxu0 0.0
    %648 = vmatpush1.msra.mxu0 %v622
    %649 = vmatprep.subr.mxu0 0.0
    %650 = vmatpush1.msra.mxu0 %v623
    %651 = vmatprep.subr.mxu0 0.0
    %652 = vmatpush1.msra.mxu0 %v624
    %653 = vmatprep.subr.mxu0 0.0
    %654 = vmatpush1.msra.mxu0 %v625
    %655 = vmatprep.subr.mxu0 0.0
    %656 = vmatpush1.msra.mxu0 %v626
    %657 = vmatprep.subr.mxu0 0.0
    %658 = vmatpush1.msra.mxu0 %v627
    %659 = vmatprep.subr.mxu0 0.0
    %660 = vmatpush1.msra.mxu0 %v628
    %661 = vmatprep.subr.mxu0 0.0
    %662 = vmatpush1.msra.mxu0 %v629
    %663 = vmatprep.subr.mxu0 0.0
    %664 = vmatpush1.msra.mxu0 %v630
    %665 = vmatprep.subr.mxu0 0.0
    %666 = vmatpush1.msra.mxu0 %v631
    %667 = vmatprep.subr.mxu0 0.0
    %668 = vmatpush1.msra.mxu0 %v632
    %669 = vmatprep.subr.mxu0 0.0
    %670 = vmatpush1.msra.mxu0 %v633
    %671 = vmatprep.subr.mxu0 0.0
    %672 = vmatpush1.msra.mxu0 %v634
    %673 = vmatprep.subr.mxu0 0.0
    %674 = vmatpush1.msra.mxu0 %v635
    %675 = vmatprep.subr.mxu0 0.0
    %676 = vmatpush1.msra.mxu0 0.0
    %677 = vmatprep.subr.mxu0 0.0
    %678 = vmatpush1.msra.mxu0 0.0
    %679 = vmatprep.subr.mxu0 0.0
    %680 = vmatpush1.msra.mxu0 0.0
    %681 = vmatprep.subr.mxu0 0.0
    %682 = vmatpush1.msra.mxu0 0.0
    %683 = vmatprep.subr.mxu0 0.0
    %684 = vmatpush1.msra.mxu0 0.0
    %685 = vmatprep.subr.mxu0 0.0
    %686 = vmatpush1.msra.mxu0 0.0
    %687 = vmatprep.subr.mxu0 0.0
    %688 = vmatpush1.msra.mxu0 0.0
    %689 = vmatprep.subr.mxu0 0.0
    %690 = vmatpush1.msra.mxu0 0.0
    %691 = vmatprep.subr.mxu0 0.0
    %692 = vmatpush1.msra.mxu0 0.0
    %693 = vmatprep.subr.mxu0 0.0
    %694 = vmatpush1.msra.mxu0 0.0
    %695 = vmatprep.subr.mxu0 0.0
    %696 = vmatpush1.msra.mxu0 0.0
    %697 = vmatprep.subr.mxu0 0.0
    %698 = vmatpush1.msra.mxu0 0.0
    %699 = vmatprep.subr.mxu0 0.0
    %700 = vmatpush1.msra.mxu0 0.0
    %701 = vmatprep.subr.mxu0 0.0
    %702 = vmatpush1.msra.mxu0 0.0
    %703 = vmatprep.subr.mxu0 0.0
    %704 = vmatpush1.msra.mxu0 0.0
    %705 = vmatprep.subr.mxu0 0.0
    %706 = vmatpush1.msra.mxu0 0.0
    %707 = vmatprep.mubr.f32.mxu0 0.0
    %708 = vmatmul.mubr.f32.gmra.mrb[0].mxu0 %v618
    %v709 = vpop.f32.mrb[0].mxu0
    %v710 = vadd.f32 %v641, %v709
    %v711 = vpop.f32.mrb[0].mxu0
    %712 = vmatprep.mubr.f32.mxu0 0.0
    %713 = vmatmul.mubr.f32.gmra.mrb[0].mxu0 %v619
    %v714 = vpop.f32.mrb[0].mxu0
    %v715 = vadd.f32 %v641, %v714
    %v716 = vpop.f32.mrb[0].mxu0
    %717 = vdwg.mxu0
    %718 = vst [vmem:[%s6] sm:$0xff] %v710
    %719 = vst [vmem:[%s6 + $0x8] sm:$0xff] %v715
    // Predicated region
    $region38: #{timestep_embedder.1} parent=1 // pred_check
      _
    $region39: #{timestep_embedder.1} parent=1 // pred_check_branch
      %721 = sbr.rel (0) target = $region41
    $region40: #{timestep_embedder.1} parent=1 // pred_region
      _
    $region41: #{timestep_embedder.1} parent=1 // pred_fallthru
      _
    // Predicated region
    $region42: #{timestep_embedder.1} parent=1 // pred_check
      _
    $region43: #{timestep_embedder.1} parent=1 // pred_check_branch
      %723 = sbr.rel (0) target = $region45
    $region44: #{timestep_embedder.1} parent=1 // pred_region
      _
    $region45: #{timestep_embedder.1} parent=1 // pred_fallthru
      _
    %724 = vsyncpa [#allocation4], 1
    %725 = vsyncpa [#allocation6], 1

</llo_original>
